<compile_context>
chip_gen: v6e
topology: v6e:2x2x1
jax: 0.10.0
libtpu: 0.0.40
codegen_flags: <defaults>
</compile_context>

<pallas_src>
import functools

import jax
import jax.numpy as jnp
from jax.experimental import pallas as pl
from jax.experimental.pallas import tpu as pltpu


def _round_up(x, m):
    return ((x + m - 1) // m) * m


def ddqn_kernel(x_ref, w1_ref, b1_ref, w2_ref, b2_ref, w3_ref, b3_ref, o_ref):
    # Layer 1: Linear(D -> 128) + ReLU.  bf16 matmul operands, f32 accumulate;
    # bias-add / ReLU kept in f32 (v5e VPU has no bf16 elementwise path).
    x = x_ref[...].astype(jnp.bfloat16)
    h1 = jnp.dot(x, w1_ref[...], preferred_element_type=jnp.float32)
    h1 = jnp.maximum(h1 + b1_ref[...], 0.0)

    # Layer 2: Linear(128 -> 128) + ReLU.
    h2 = jnp.dot(h1.astype(jnp.bfloat16), w2_ref[...],
                 preferred_element_type=jnp.float32)
    h2 = jnp.maximum(h2 + b2_ref[...], 0.0)

    # Layer 3: Linear(128 -> A_pad), no activation (Q-values, lane-padded).
    q = jnp.dot(h2.astype(jnp.bfloat16), w3_ref[...],
                preferred_element_type=jnp.float32)
    o_ref[...] = (q + b3_ref[...]).astype(o_ref.dtype)


@functools.partial(jax.jit, static_argnames=("tile_b",))
def ddqn_forward(state, params, *, tile_b=512):
    """state: (B, D) f32. params: bf16 (in,out) weights, f32 (1,out) biases.

    Returns Q-values of shape (B, n_actions), float32.
    """
    w1, b1 = params["w1"], params["b1"]
    w2, b2 = params["w2"], params["b2"]
    w3, b3 = params["w3"], params["b3"]

    B, D = state.shape
    H1 = w1.shape[1]
    H2 = w2.shape[1]
    A = w3.shape[1]

    # Lane-dense output: pad n_actions up to a multiple of 128 lanes with zero
    # weight/bias columns so the kernel's store is an unmasked full-lane vst.
    A_pad = _round_up(A, 128)
    if A_pad != A:
        w3 = jnp.pad(w3, ((0, 0), (0, A_pad - A)))
        b3 = jnp.pad(b3, ((0, 0), (0, A_pad - A)))

    # Batch tiling: each grid step handles TILE_B rows; weights stay resident.
    TILE_B = min(tile_b, _round_up(B, 8))
    B_pad = _round_up(B, TILE_B)
    if B_pad != B:
        state = jnp.pad(state, ((0, B_pad - B), (0, 0)))
    grid = (B_pad // TILE_B,)

    def resident(shape):
        # Same block on every grid step -> DMA'd once, lives in VMEM throughout.
        return pl.BlockSpec(shape, lambda i: (0, 0))

    out = pl.pallas_call(
        ddqn_kernel,
        out_shape=jax.ShapeDtypeStruct((B_pad, A_pad), jnp.float32),
        grid=grid,
        in_specs=[
            pl.BlockSpec((TILE_B, D), lambda i: (i, 0)),   # state tile
            resident((D, H1)), resident((1, H1)),          # layer 1
            resident((H1, H2)), resident((1, H2)),         # layer 2
            resident((H2, A_pad)), resident((1, A_pad)),   # layer 3 (padded)
        ],
        out_specs=pl.BlockSpec((TILE_B, A_pad), lambda i: (i, 0)),
        compiler_params=pltpu.CompilerParams(
            dimension_semantics=("parallel",)),            # v7x: 2 TCs
    )(state, w1, b1, w2, b2, w3, b3)

    return out[:B, :A]


def init_params(key, input_dims, n_actions, hidden=128):
    """Deterministic init mimicking nn.Linear default (uniform +/- 1/sqrt(fan_in)).
    Weights stored transposed relative to PyTorch ((in, out)) and cast to bf16;
    biases stay f32."""
    keys = jax.random.split(key, 6)

    def linear(kw, kb, fan_in, fan_out):
        bound = 1.0 / jnp.sqrt(fan_in)
        w = jax.random.uniform(kw, (fan_in, fan_out), jnp.float32, -bound, bound)
        b = jax.random.uniform(kb, (1, fan_out), jnp.float32, -bound, bound)
        return w.astype(jnp.bfloat16), b

    w1, b1 = linear(keys[0], keys[1], input_dims, hidden)
    w2, b2 = linear(keys[2], keys[3], hidden, hidden)
    w3, b3 = linear(keys[4], keys[5], hidden, n_actions)
    return {"w1": w1, "b1": b1, "w2": w2, "b2": b2, "w3": w3, "b3": b3}


if __name__ == "__main__":
    key = jax.random.PRNGKey(0)
    k_params, k_state = jax.random.split(key)

    B = 8            # batch of states
    INPUT_DIMS = 8   # observation dim (input_dims)
    N_ACTIONS = 4    # n_actions

    params = init_params(k_params, INPUT_DIMS, N_ACTIONS, hidden=128)
    state = jax.random.normal(k_state, (B, INPUT_DIMS), jnp.float32)

    q_values = ddqn_forward(state, params)
    jax.block_until_ready(q_values)

    # Pure-JAX reference with identical dtype handling (bf16 matmul operands,
    # f32 accumulation, f32 bias/ReLU).
    def ref_forward(x, p):
        h1 = jnp.maximum(
            jnp.dot(x.astype(jnp.bfloat16), p["w1"],
                    preferred_element_type=jnp.float32) + p["b1"], 0.0)
        h2 = jnp.maximum(
            jnp.dot(h1.astype(jnp.bfloat16), p["w2"],
                    preferred_element_type=jnp.float32) + p["b2"], 0.0)
        return jnp.dot(h2.astype(jnp.bfloat16), p["w3"],
                       preferred_element_type=jnp.float32) + p["b3"]

    q_ref = ref_forward(state, params)
    assert q_values.shape == (B, N_ACTIONS)
    assert jnp.allclose(q_values, q_ref, atol=1e-4, rtol=1e-4), (
        float(jnp.max(jnp.abs(q_values - q_ref))))

    # TODO(synk): optimizer (Adam), SmoothL1Loss and checkpoint I/O from the
    # PyTorch module are training/host-side concerns, not part of forward().
    print("KERNEL_OK")
</pallas_src>

<mosaic_0001>
module attributes {stable_mosaic.version = 11 : i64} {
  func.func @ddqn_kernel(%arg0: i32, %arg1: memref<8x8xf32, #tpu.memory_space<vmem>>, %arg2: memref<8x128xbf16, #tpu.memory_space<vmem>>, %arg3: memref<1x128xf32, #tpu.memory_space<vmem>>, %arg4: memref<128x128xbf16, #tpu.memory_space<vmem>>, %arg5: memref<1x128xf32, #tpu.memory_space<vmem>>, %arg6: memref<128x128xbf16, #tpu.memory_space<vmem>>, %arg7: memref<1x128xf32, #tpu.memory_space<vmem>>, %arg8: memref<8x128xf32, #tpu.memory_space<vmem>>) attributes {dimension_semantics = [#tpu.dimension_semantics<parallel>], iteration_bounds = array<i64: 1>, scalar_prefetch = 0 : i64, scratch_operands = 0 : i64, tpu.core_type = #tpu.core_type<tc>, window_params = [{transform_indices = @transform_0, window_bounds = array<i64: 8, 8>}, {pipeline_mode = #tpu.pipeline_mode<synchronous>, transform_indices = @transform_1, window_bounds = array<i64: 8, 128>}, {pipeline_mode = #tpu.pipeline_mode<synchronous>, transform_indices = @transform_2, window_bounds = array<i64: 1, 128>}, {pipeline_mode = #tpu.pipeline_mode<synchronous>, transform_indices = @transform_3, window_bounds = array<i64: 128, 128>}, {pipeline_mode = #tpu.pipeline_mode<synchronous>, transform_indices = @transform_4, window_bounds = array<i64: 1, 128>}, {pipeline_mode = #tpu.pipeline_mode<synchronous>, transform_indices = @transform_5, window_bounds = array<i64: 128, 128>}, {pipeline_mode = #tpu.pipeline_mode<synchronous>, transform_indices = @transform_6, window_bounds = array<i64: 1, 128>}, {transform_indices = @transform_7, window_bounds = array<i64: 8, 128>}]} {
    %c0 = arith.constant 0 : index
    %c0_0 = arith.constant 0 : index
    %0 = vector.load %arg1[%c0, %c0_0] : memref<8x8xf32, #tpu.memory_space<vmem>>, vector<8x8xf32>
    %1 = arith.truncf %0 : vector<8x8xf32> to vector<8x8xbf16>
    %c0_1 = arith.constant 0 : index
    %c0_2 = arith.constant 0 : index
    %2 = vector.load %arg2[%c0_1, %c0_2] : memref<8x128xbf16, #tpu.memory_space<vmem>>, vector<8x128xbf16>
    %cst = arith.constant dense<0.000000e+00> : vector<8x128xf32>
    %3 = tpu.matmul %1, %2, %cst {dimension_numbers = #tpu.dot_dimension_numbers<[1], [0], [0], [1], [0, 0, 1, 1], [], []>} : vector<8x8xbf16>, vector<8x128xbf16>, vector<8x128xf32> -> vector<8x128xf32>
    %c0_3 = arith.constant 0 : index
    %c0_4 = arith.constant 0 : index
    %4 = vector.load %arg3[%c0_3, %c0_4] : memref<1x128xf32, #tpu.memory_space<vmem>>, vector<1x128xf32>
    %5 = vector.broadcast %4 : vector<1x128xf32> to vector<8x128xf32>
    %6 = arith.addf %3, %5 : vector<8x128xf32>
    %cst_5 = arith.constant 0.000000e+00 : f32
    %7 = vector.broadcast %cst_5 : f32 to vector<8x128xf32>
    %8 = arith.maximumf %6, %7 : vector<8x128xf32>
    %9 = arith.truncf %8 : vector<8x128xf32> to vector<8x128xbf16>
    %c0_6 = arith.constant 0 : index
    %c0_7 = arith.constant 0 : index
    %10 = vector.load %arg4[%c0_6, %c0_7] : memref<128x128xbf16, #tpu.memory_space<vmem>>, vector<128x128xbf16>
    %cst_8 = arith.constant dense<0.000000e+00> : vector<8x128xf32>
    %11 = tpu.matmul %9, %10, %cst_8 {dimension_numbers = #tpu.dot_dimension_numbers<[1], [0], [0], [1], [0, 0, 1, 1], [], []>} : vector<8x128xbf16>, vector<128x128xbf16>, vector<8x128xf32> -> vector<8x128xf32>
    %c0_9 = arith.constant 0 : index
    %c0_10 = arith.constant 0 : index
    %12 = vector.load %arg5[%c0_9, %c0_10] : memref<1x128xf32, #tpu.memory_space<vmem>>, vector<1x128xf32>
    %13 = vector.broadcast %12 : vector<1x128xf32> to vector<8x128xf32>
    %14 = arith.addf %11, %13 : vector<8x128xf32>
    %cst_11 = arith.constant 0.000000e+00 : f32
    %15 = vector.broadcast %cst_11 : f32 to vector<8x128xf32>
    %16 = arith.maximumf %14, %15 : vector<8x128xf32>
    %17 = arith.truncf %16 : vector<8x128xf32> to vector<8x128xbf16>
    %c0_12 = arith.constant 0 : index
    %c0_13 = arith.constant 0 : index
    %18 = vector.load %arg6[%c0_12, %c0_13] : memref<128x128xbf16, #tpu.memory_space<vmem>>, vector<128x128xbf16>
    %cst_14 = arith.constant dense<0.000000e+00> : vector<8x128xf32>
    %19 = tpu.matmul %17, %18, %cst_14 {dimension_numbers = #tpu.dot_dimension_numbers<[1], [0], [0], [1], [0, 0, 1, 1], [], []>} : vector<8x128xbf16>, vector<128x128xbf16>, vector<8x128xf32> -> vector<8x128xf32>
    %c0_15 = arith.constant 0 : index
    %c0_16 = arith.constant 0 : index
    %20 = vector.load %arg7[%c0_15, %c0_16] : memref<1x128xf32, #tpu.memory_space<vmem>>, vector<1x128xf32>
    %21 = vector.broadcast %20 : vector<1x128xf32> to vector<8x128xf32>
    %22 = arith.addf %19, %21 : vector<8x128xf32>
    %c0_17 = arith.constant 0 : index
    %c0_18 = arith.constant 0 : index
    %23 = vector.load %arg8[%c0_17, %c0_18] : memref<8x128xf32, #tpu.memory_space<vmem>>, vector<8x128xf32>
    tpu.vector_store %arg8[%c0_17, %c0_18], %22 {strides = array<i32>} : memref<8x128xf32, #tpu.memory_space<vmem>>, vector<8x128xf32>,
    return
  }
  func.func @transform_0(%arg0: i32) -> (i32, i32) {
    %c0_i32 = arith.constant 0 : i32
    %c0_i32_0 = arith.constant 0 : i32
    return %arg0, %c0_i32 : i32, i32
  }
  func.func @transform_1(%arg0: i32) -> (i32, i32) {
    %c0_i32 = arith.constant 0 : i32
    %c0_i32_0 = arith.constant 0 : i32
    %c0_i32_1 = arith.constant 0 : i32
    return %c0_i32, %c0_i32_0 : i32, i32
  }
  func.func @transform_2(%arg0: i32) -> (i32, i32) {
    %c0_i32 = arith.constant 0 : i32
    %c0_i32_0 = arith.constant 0 : i32
    %c0_i32_1 = arith.constant 0 : i32
    return %c0_i32, %c0_i32_0 : i32, i32
  }
  func.func @transform_3(%arg0: i32) -> (i32, i32) {
    %c0_i32 = arith.constant 0 : i32
    %c0_i32_0 = arith.constant 0 : i32
    %c0_i32_1 = arith.constant 0 : i32
    return %c0_i32, %c0_i32_0 : i32, i32
  }
  func.func @transform_4(%arg0: i32) -> (i32, i32) {
    %c0_i32 = arith.constant 0 : i32
    %c0_i32_0 = arith.constant 0 : i32
    %c0_i32_1 = arith.constant 0 : i32
    return %c0_i32, %c0_i32_0 : i32, i32
  }
  func.func @transform_5(%arg0: i32) -> (i32, i32) {
    %c0_i32 = arith.constant 0 : i32
    %c0_i32_0 = arith.constant 0 : i32
    %c0_i32_1 = arith.constant 0 : i32
    return %c0_i32, %c0_i32_0 : i32, i32
  }
  func.func @transform_6(%arg0: i32) -> (i32, i32) {
    %c0_i32 = arith.constant 0 : i32
    %c0_i32_0 = arith.constant 0 : i32
    %c0_i32_1 = arith.constant 0 : i32
    return %c0_i32, %c0_i32_0 : i32, i32
  }
  func.func @transform_7(%arg0: i32) -> (i32, i32) {
    %c0_i32 = arith.constant 0 : i32
    %c0_i32_0 = arith.constant 0 : i32
    return %arg0, %c0_i32 : i32, i32
  }
}

</mosaic_0001>

<llo_original>
// kernel: ddqn_forward.1
$region0: #{ddqn_forward.1}
  #allocation0 [shape = 'u32[]', space=smem, size = 0x4, offset = 0x4, fixed_abs, tag = 'smem constant byte address 0x4 - core index']
  #allocation1 [shape = 'u32[144,128]{1,0:T(1,128)}', space=vmem, size = 0x12000, scoped, tag = 'internal scratch']
  %s0 = inlined_call_operand.vmem [shape: f32[8,8], index: 0, kind: input, shape index: {}]
  %s1 = inlined_call_operand.vmem [shape: bf16[8,128], index: 1, kind: input, shape index: {}]
  %s2 = inlined_call_operand.vmem [shape: f32[1,128], index: 2, kind: input, shape index: {}]
  %s3 = inlined_call_operand.vmem [shape: bf16[128,128], index: 3, kind: input, shape index: {}]
  %s4 = inlined_call_operand.vmem [shape: f32[1,128], index: 4, kind: input, shape index: {}]
  %s5 = inlined_call_operand.vmem [shape: bf16[128,128], index: 5, kind: input, shape index: {}]
  %s6 = inlined_call_operand.vmem [shape: f32[1,128], index: 6, kind: input, shape index: {}]
  %s7 = inlined_call_operand.vmem [shape: f32[8,128], index: 7, kind: output, shape index: {}]
  %s8 = sld [smem:[#allocation0]]
  $region38: #{ddqn_forward.1} parent=0
    _
  %s10 = ssub.s32 1, %s8
  %s11 = scalar_select 0, %s10, %s8
  // Predicated region
  $region2: #{ddqn_forward.1} parent=0 // pred_check
    _
  $region3: #{ddqn_forward.1} parent=0 // pred_check_branch
    %13 = sbr.rel (0) target = $region5
  $region4: #{ddqn_forward.1} parent=0 // pred_region
    _
  $region5: #{ddqn_forward.1} parent=0 // pred_fallthru
    _
  // Predicated region
  $region6: #{ddqn_forward.1} parent=0 // pred_check
    _
  $region7: #{ddqn_forward.1} parent=0 // pred_check_branch
    %15 = sbr.rel (0) target = $region9
  $region8: #{ddqn_forward.1} parent=0 // pred_region
    _
  $region9: #{ddqn_forward.1} parent=0 // pred_fallthru
    _
  // Predicated region
  $region10: #{ddqn_forward.1} parent=0 // pred_check
    _
  $region11: #{ddqn_forward.1} parent=0 // pred_check_branch
    %17 = sbr.rel (0) target = $region13
  $region12: #{ddqn_forward.1} parent=0 // pred_region
    _
  $region13: #{ddqn_forward.1} parent=0 // pred_fallthru
    _
  // Predicated region
  $region14: #{ddqn_forward.1} parent=0 // pred_check
    _
  $region15: #{ddqn_forward.1} parent=0 // pred_check_branch
    %19 = sbr.rel (0) target = $region17
  $region16: #{ddqn_forward.1} parent=0 // pred_region
    _
  $region17: #{ddqn_forward.1} parent=0 // pred_fallthru
    _
  // Predicated region
  $region18: #{ddqn_forward.1} parent=0 // pred_check
    _
  $region19: #{ddqn_forward.1} parent=0 // pred_check_branch
    %21 = sbr.rel (0) target = $region21
  $region20: #{ddqn_forward.1} parent=0 // pred_region
    _
  $region21: #{ddqn_forward.1} parent=0 // pred_fallthru
    _
  // Predicated region
  $region22: #{ddqn_forward.1} parent=0 // pred_check
    _
  $region23: #{ddqn_forward.1} parent=0 // pred_check_branch
    %23 = sbr.rel (0) target = $region25
  $region24: #{ddqn_forward.1} parent=0 // pred_region
    _
  $region25: #{ddqn_forward.1} parent=0 // pred_fallthru
    _
  // Predicated region
  $region26: #{ddqn_forward.1} parent=0 // pred_check
    _
  $region27: #{ddqn_forward.1} parent=0 // pred_check_branch
    %25 = sbr.rel (0) target = $region29
  $region28: #{ddqn_forward.1} parent=0 // pred_region
    _
  $region29: #{ddqn_forward.1} parent=0 // pred_fallthru
    _
  %v27 = vld [vmem:[%s0] sm:$0xff]
  %v28 = vpack.c.bf16 %v27, %v27
  %v29 = vld [vmem:[%s1] sm:$0xf]
  %v30 = vld [vmem:[%s2] sm:$0x1]
  %v32 = vlaneseq
  %v33 = vshrl.u32 %v32, 7
  %v34 = vsub.s32 0, %v33
  %v35 = vrot.slane %v30, %v34
  %vm37 = vcmask 64512
  %v39 = vsel %vm37, %v28, 0
  %vm41 = vcmask 1043456
  %v43 = vsel %vm41, %v29, 0
  %45 = vmatprep.subr.bf16.mxu0 0
  %46 = vmatpush1.bf16.msra.mxu0 0
  %47 = vmatprep.subr.bf16.mxu0 0
  %48 = vmatpush1.bf16.msra.mxu0 0
  %49 = vmatprep.subr.bf16.mxu0 0
  %50 = vmatpush1.bf16.msra.mxu0 0
  %51 = vmatprep.subr.bf16.mxu0 0
  %52 = vmatpush1.bf16.msra.mxu0 0
  %53 = vmatprep.subr.bf16.mxu0 0
  %54 = vmatpush1.bf16.msra.mxu0 0
  %55 = vmatprep.subr.bf16.mxu0 0
  %56 = vmatpush1.bf16.msra.mxu0 0
  %57 = vmatprep.subr.bf16.mxu0 0
  %58 = vmatpush1.bf16.msra.mxu0 0
  %59 = vmatprep.subr.bf16.mxu0 0
  %60 = vmatpush1.bf16.msra.mxu0 %v43
  %61 = vmatprep.subr.bf16.mxu0 0
  %62 = vmatpush2.bf16.msra.mxu0 0
  %63 = vmatprep.subr.bf16.mxu0 0
  %64 = vmatpush2.bf16.msra.mxu0 0
  %65 = vmatprep.subr.bf16.mxu0 0
  %66 = vmatpush2.bf16.msra.mxu0 0
  %67 = vmatprep.subr.bf16.mxu0 0
  %68 = vmatpush2.bf16.msra.mxu0 0
  %69 = vmatprep.subr.bf16.mxu0 0
  %70 = vmatpush2.bf16.msra.mxu0 0
  %71 = vmatprep.subr.bf16.mxu0 0
  %72 = vmatpush2.bf16.msra.mxu0 0
  %73 = vmatprep.subr.bf16.mxu0 0
  %74 = vmatpush2.bf16.msra.mxu0 0
  %75 = vmatprep.subr.bf16.mxu0 0
  %76 = vmatpush2.bf16.msra.mxu0 0
  %77 = vmatprep.mubr.bf16.mxu0 0
  %78 = vmatmul.mubr.bf16.gmra.mxu0 %v39
  %v79 = vpop.f32.mrf.mxu0
  %v80 = vadd.f32 %v35, %v79
  %v81 = vpop.f32.mrf.mxu0
  %v82 = vpop.f32.mrf.mxu0
  %v83 = vpop.f32.mrf.mxu0
  %84 = vdwg.mxu0
  %v85 = vmax.f32 %v80, 0.0
  %v86 = vpack.c.bf16 %v85, %v85
  %v87 = vld [vmem:[%s3] sm:$0xf]
  %v88 = vld [vmem:[%s3 + $0x4] sm:$0xf]
  %v89 = vld [vmem:[%s3 + $0x8] sm:$0xf]
  %v90 = vld [vmem:[%s3 + $0xc] sm:$0xf]
  %v91 = vld [vmem:[%s3 + $0x10] sm:$0xf]
  %v92 = vld [vmem:[%s3 + $0x14] sm:$0xf]
  %v93 = vld [vmem:[%s3 + $0x18] sm:$0xf]
  %v94 = vld [vmem:[%s3 + $0x1c] sm:$0xf]
  %v95 = vld [vmem:[%s3 + $0x20] sm:$0xf]
  %v96 = vld [vmem:[%s3 + $0x24] sm:$0xf]
  %v97 = vld [vmem:[%s3 + $0x28] sm:$0xf]
  %v98 = vld [vmem:[%s3 + $0x2c] sm:$0xf]
  %v99 = vld [vmem:[%s3 + $0x30] sm:$0xf]
  %v100 = vld [vmem:[%s3 + $0x34] sm:$0xf]
  %v101 = vld [vmem:[%s3 + $0x38] sm:$0xf]
  %v102 = vld [vmem:[%s3 + $0x3c] sm:$0xf]
  %v103 = vld [vmem:[%s4] sm:$0x1]
  %v105 = vlaneseq
  %v106 = vshrl.u32 %v105, 7
  %v107 = vsub.s32 0, %v106
  %v108 = vrot.slane %v103, %v107
  %v126 = vunpack.c.l.b16 %v87
  %v127 = vunpack.c.l.b16 %v88
  %v128 = vunpack.c.l.b16 %v89
  %v129 = vunpack.c.l.b16 %v90
  %v130 = vunpack.c.l.b16 %v91
  %v131 = vunpack.c.l.b16 %v92
  %v132 = vunpack.c.l.b16 %v93
  %v133 = vunpack.c.l.b16 %v94
  %v134 = vunpack.c.l.b16 %v95
  %v135 = vunpack.c.l.b16 %v96
  %v136 = vunpack.c.l.b16 %v97
  %v137 = vunpack.c.l.b16 %v98
  %v138 = vunpack.c.l.b16 %v99
  %v139 = vunpack.c.l.b16 %v100
  %v140 = vunpack.c.l.b16 %v101
  %v141 = vunpack.c.l.b16 %v102
  %v142 = vpack.c.b16 %v127, %v126
  %v143 = vpack.c.b16 %v129, %v128
  %v144 = vpack.c.b16 %v131, %v130
  %v145 = vpack.c.b16 %v133, %v132
  %v146 = vpack.c.b16 %v135, %v134
  %v147 = vpack.c.b16 %v137, %v136
  %v148 = vpack.c.b16 %v139, %v138
  %v149 = vpack.c.b16 %v141, %v140
  %158 = vmatprep.subr.bf16.mxu0 0
  %159 = vmatpush1.bf16.msra.mxu0 %v149
  %160 = vmatprep.subr.bf16.mxu0 0
  %161 = vmatpush1.bf16.msra.mxu0 %v148
  %162 = vmatprep.subr.bf16.mxu0 0
  %163 = vmatpush1.bf16.msra.mxu0 %v147
  %164 = vmatprep.subr.bf16.mxu0 0
  %165 = vmatpush1.bf16.msra.mxu0 %v146
  %166 = vmatprep.subr.bf16.mxu0 0
  %167 = vmatpush1.bf16.msra.mxu0 %v145
  %168 = vmatprep.subr.bf16.mxu0 0
  %169 = vmatpush1.bf16.msra.mxu0 %v144
  %170 = vmatprep.subr.bf16.mxu0 0
  %171 = vmatpush1.bf16.msra.mxu0 %v143
  %172 = vmatprep.subr.bf16.mxu0 0
  %173 = vmatpush1.bf16.msra.mxu0 %v142
  %174 = vmatprep.subr.bf16.mxu0 0
  %175 = vmatpush2.bf16.msra.mxu0 0
  %176 = vmatprep.subr.bf16.mxu0 0
  %177 = vmatpush2.bf16.msra.mxu0 0
  %178 = vmatprep.subr.bf16.mxu0 0
  %179 = vmatpush2.bf16.msra.mxu0 0
  %180 = vmatprep.subr.bf16.mxu0 0
  %181 = vmatpush2.bf16.msra.mxu0 0
  %182 = vmatprep.subr.bf16.mxu0 0
  %183 = vmatpush2.bf16.msra.mxu0 0
  %184 = vmatprep.subr.bf16.mxu0 0
  %185 = vmatpush2.bf16.msra.mxu0 0
  %186 = vmatprep.subr.bf16.mxu0 0
  %187 = vmatpush2.bf16.msra.mxu0 0
  %188 = vmatprep.subr.bf16.mxu0 0
  %189 = vmatpush2.bf16.msra.mxu0 0
  %190 = vmatprep.mubr.bf16.mxu0 0
  %191 = vmatmul.mubr.bf16.gmra.mxu0 %v86
  %v192 = vpop.f32.mrf.mxu0
  %v193 = vadd.f32 %v108, %v192
  %v194 = vpop.f32.mrf.mxu0
  %v195 = vpop.f32.mrf.mxu0
  %v196 = vpop.f32.mrf.mxu0
  %197 = vdwg.mxu0
  %v198 = vmax.f32 %v193, 0.0
  %v199 = vpack.c.bf16 %v198, %v198
  %v200 = vld [vmem:[%s5] sm:$0xf]
  %v201 = vld [vmem:[%s5 + $0x4] sm:$0xf]
  %v202 = vld [vmem:[%s5 + $0x8] sm:$0xf]
  %v203 = vld [vmem:[%s5 + $0xc] sm:$0xf]
  %v204 = vld [vmem:[%s5 + $0x10] sm:$0xf]
  %v205 = vld [vmem:[%s5 + $0x14] sm:$0xf]
  %v206 = vld [vmem:[%s5 + $0x18] sm:$0xf]
  %v207 = vld [vmem:[%s5 + $0x1c] sm:$0xf]
  %v208 = vld [vmem:[%s5 + $0x20] sm:$0xf]
  %v209 = vld [vmem:[%s5 + $0x24] sm:$0xf]
  %v210 = vld [vmem:[%s5 + $0x28] sm:$0xf]
  %v211 = vld [vmem:[%s5 + $0x2c] sm:$0xf]
  %v212 = vld [vmem:[%s5 + $0x30] sm:$0xf]
  %v213 = vld [vmem:[%s5 + $0x34] sm:$0xf]
  %v214 = vld [vmem:[%s5 + $0x38] sm:$0xf]
  %v215 = vld [vmem:[%s5 + $0x3c] sm:$0xf]
  %v216 = vld [vmem:[%s6] sm:$0x1]
  %v218 = vlaneseq
  %v219 = vshrl.u32 %v218, 7
  %v220 = vsub.s32 0, %v219
  %v221 = vrot.slane %v216, %v220
  %v239 = vunpack.c.l.b16 %v200
  %v240 = vunpack.c.l.b16 %v201
  %v241 = vunpack.c.l.b16 %v202
  %v242 = vunpack.c.l.b16 %v203
  %v243 = vunpack.c.l.b16 %v204
  %v244 = vunpack.c.l.b16 %v205
  %v245 = vunpack.c.l.b16 %v206
  %v246 = vunpack.c.l.b16 %v207
  %v247 = vunpack.c.l.b16 %v208
  %v248 = vunpack.c.l.b16 %v209
  %v249 = vunpack.c.l.b16 %v210
  %v250 = vunpack.c.l.b16 %v211
  %v251 = vunpack.c.l.b16 %v212
  %v252 = vunpack.c.l.b16 %v213
  %v253 = vunpack.c.l.b16 %v214
  %v254 = vunpack.c.l.b16 %v215
  %v255 = vpack.c.b16 %v240, %v239
  %v256 = vpack.c.b16 %v242, %v241
  %v257 = vpack.c.b16 %v244, %v243
  %v258 = vpack.c.b16 %v246, %v245
  %v259 = vpack.c.b16 %v248, %v247
  %v260 = vpack.c.b16 %v250, %v249
  %v261 = vpack.c.b16 %v252, %v251
  %v262 = vpack.c.b16 %v254, %v253
  %271 = vmatprep.subr.bf16.mxu0 0
  %272 = vmatpush1.bf16.msra.mxu0 %v262
  %273 = vmatprep.subr.bf16.mxu0 0
  %274 = vmatpush1.bf16.msra.mxu0 %v261
  %275 = vmatprep.subr.bf16.mxu0 0
  %276 = vmatpush1.bf16.msra.mxu0 %v260
  %277 = vmatprep.subr.bf16.mxu0 0
  %278 = vmatpush1.bf16.msra.mxu0 %v259
  %279 = vmatprep.subr.bf16.mxu0 0
  %280 = vmatpush1.bf16.msra.mxu0 %v258
  %281 = vmatprep.subr.bf16.mxu0 0
  %282 = vmatpush1.bf16.msra.mxu0 %v257
  %283 = vmatprep.subr.bf16.mxu0 0
  %284 = vmatpush1.bf16.msra.mxu0 %v256
  %285 = vmatprep.subr.bf16.mxu0 0
  %286 = vmatpush1.bf16.msra.mxu0 %v255
  %287 = vmatprep.subr.bf16.mxu0 0
  %288 = vmatpush2.bf16.msra.mxu0 0
  %289 = vmatprep.subr.bf16.mxu0 0
  %290 = vmatpush2.bf16.msra.mxu0 0
  %291 = vmatprep.subr.bf16.mxu0 0
  %292 = vmatpush2.bf16.msra.mxu0 0
  %293 = vmatprep.subr.bf16.mxu0 0
  %294 = vmatpush2.bf16.msra.mxu0 0
  %295 = vmatprep.subr.bf16.mxu0 0
  %296 = vmatpush2.bf16.msra.mxu0 0
  %297 = vmatprep.subr.bf16.mxu0 0
  %298 = vmatpush2.bf16.msra.mxu0 0
  %299 = vmatprep.subr.bf16.mxu0 0
  %300 = vmatpush2.bf16.msra.mxu0 0
  %301 = vmatprep.subr.bf16.mxu0 0
  %302 = vmatpush2.bf16.msra.mxu0 0
  %303 = vmatprep.mubr.bf16.mxu0 0
  %304 = vmatmul.mubr.bf16.gmra.mxu0 %v199
  %v305 = vpop.f32.mrf.mxu0
  %v306 = vadd.f32 %v221, %v305
  %v307 = vpop.f32.mrf.mxu0
  %v308 = vpop.f32.mrf.mxu0
  %v309 = vpop.f32.mrf.mxu0
  %310 = vdwg.mxu0
  %311 = vst [vmem:[%s7] sm:$0xff] %v306
  // Predicated region
  $region30: #{ddqn_forward.1} parent=0 // pred_check
    _
  $region31: #{ddqn_forward.1} parent=0 // pred_check_branch
    %313 = sbr.rel (0) target = $region33
  $region32: #{ddqn_forward.1} parent=0 // pred_region
    _
  $region33: #{ddqn_forward.1} parent=0 // pred_fallthru
    _
  // Predicated region
  $region34: #{ddqn_forward.1} parent=0 // pred_check
    _
  $region35: #{ddqn_forward.1} parent=0 // pred_check_branch
    %315 = sbr.rel (0) target = $region37
  $region36: #{ddqn_forward.1} parent=0 // pred_region
    _
  $region37: #{ddqn_forward.1} parent=0 // pred_fallthru
    _

</llo_original>
